<compile_context>
chip_gen: v5e
topology: v5e:2x2
jax: 0.10.0
libtpu: 0.0.40
codegen_flags: <defaults>
</compile_context>

<pallas_src>
import functools
import math

import jax
import jax.numpy as jnp
import numpy as np
from jax import lax
from jax.experimental import pallas as pl
from jax.experimental.pallas import tpu as pltpu


# ------------------------------- kernel -------------------------------------

def _mha_kernel(*refs, n_heads, use_mask, self_attn, kv_same):
    refs = list(refs)
    xq_ref = refs.pop(0)
    if self_attn:
        xk_ref = xv_ref = xq_ref
    elif kv_same:
        xk_ref = xv_ref = refs.pop(0)
    else:
        xk_ref = refs.pop(0)
        xv_ref = refs.pop(0)
    m_ref = refs.pop(0) if use_mask else None
    wqkv_ref, bqkv_ref, wo_ref, bo_ref, o_ref = refs

    d_model = o_ref.shape[-1]
    d_k = d_model // n_heads

    xq = xq_ref[0].astype(jnp.float32)                                # (Sq, D)

    if self_attn:
        # One fused (Sq, D) x (D, 3D) matmul -> Q|K|V; input is read once.
        qkv = (jnp.dot(xq, wqkv_ref[...], preferred_element_type=jnp.float32)
               + bqkv_ref[...])                                       # (Sq, 3D)
        q = qkv[:, :d_model]                                          # pre-scaled
        k = qkv[:, d_model:2 * d_model]
        v = qkv[:, 2 * d_model:]
    elif kv_same:
        # Cross-attention with key is value: fuse K|V into one (Sk,D)x(D,2D).
        xkv = xk_ref[0].astype(jnp.float32)                           # (Sk, D)
        q = (jnp.dot(xq, wqkv_ref[:, :d_model],
                     preferred_element_type=jnp.float32)
             + bqkv_ref[:, :d_model])
        kv = (jnp.dot(xkv, wqkv_ref[:, d_model:],
                      preferred_element_type=jnp.float32)
              + bqkv_ref[:, d_model:])                                # (Sk, 2D)
        k = kv[:, :d_model]
        v = kv[:, d_model:]
    else:
        xk = xk_ref[0].astype(jnp.float32)                            # (Sk, D)
        xv = xv_ref[0].astype(jnp.float32)                            # (Sk, D)
        q = (jnp.dot(xq, wqkv_ref[:, :d_model],
                     preferred_element_type=jnp.float32)
             + bqkv_ref[:, :d_model])
        k = (jnp.dot(xk, wqkv_ref[:, d_model:2 * d_model],
                     preferred_element_type=jnp.float32)
             + bqkv_ref[:, d_model:2 * d_model])
        v = (jnp.dot(xv, wqkv_ref[:, 2 * d_model:],
                     preferred_element_type=jnp.float32)
             + bqkv_ref[:, 2 * d_model:])

    # Hoisted out of the head loop: one comparison per batch element.
    masked = (m_ref[0] == 0) if use_mask else None                    # (Sq, Sk)

    # All heads of this batch element in one grid step; head outputs are
    # re-assembled along the last (lane) axis into a lane-dense (Sq, D) slab.
    head_outs = []
    for h in range(n_heads):
        lo = h * d_k
        hi = lo + d_k
        qh = q[:, lo:hi]                                              # (Sq, dk)
        kh = k[:, lo:hi]                                              # (Sk, dk)
        vh = v[:, lo:hi]                                              # (Sk, dk)
        # Contract on the last dims directly -> no materialized K transpose.
        s = lax.dot_general(qh, kh, (((1,), (1,)), ((), ())),
                            preferred_element_type=jnp.float32)       # (Sq, Sk)
        if use_mask:
            s = jnp.where(masked, jnp.float32(-1e9), s)
        s = s - jnp.max(s, axis=-1, keepdims=True)
        p = jnp.exp(s)
        p = p * pl.reciprocal(jnp.sum(p, axis=-1, keepdims=True), approx=True)
        head_outs.append(jnp.dot(p, vh, preferred_element_type=jnp.float32))

    attn = jnp.concatenate(head_outs, axis=-1)                        # (Sq, D)
    out = (jnp.dot(attn, wo_ref[...], preferred_element_type=jnp.float32)
           + bo_ref[...])
    o_ref[0] = out.astype(o_ref.dtype)


# ------------------------------- wrapper -------------------------------------

def multi_head_attention(query, key, value, mask, params, n_heads):
    """Fused MultiHeadedAttention forward.  query/key/value: [B, S, D]."""
    B, Sq, D = query.shape
    Sk = key.shape[1]
    d_k = D // n_heads
    scale = 1.0 / math.sqrt(d_k)

    self_attn = (query is key) and (key is value)
    kv_same = (key is value) and not self_attn
    use_mask = mask is not None

    # Pre-concatenated projection weights [D, 3D] / [1, 3D]; 1/sqrt(d_k) is
    # folded into the Q columns (one-time host-side op on tiny weights).
    wqkv = jnp.concatenate(
        [params["wq"] * scale, params["wk"], params["wv"]], axis=1)
    bqkv = jnp.concatenate(
        [params["bq"] * scale, params["bk"], params["bv"]]).reshape(1, 3 * D)
    wo = params["wo"]
    bo = params["bo"].reshape(1, D)

    inputs = [query]
    in_specs = [pl.BlockSpec((1, Sq, D), lambda b: (b, 0, 0))]
    if kv_same:
        inputs.append(key)
        in_specs.append(pl.BlockSpec((1, Sk, D), lambda b: (b, 0, 0)))
    elif not self_attn:
        inputs += [key, value]
        in_specs += [pl.BlockSpec((1, Sk, D), lambda b: (b, 0, 0)),
                     pl.BlockSpec((1, Sk, D), lambda b: (b, 0, 0))]
    if use_mask:
        # Accepts [B, Sq, Sk] or broadcastable (e.g. [B, 1, Sk]); fetched once
        # per batch element, not once per head.
        inputs.append(jnp.broadcast_to(mask, (B, Sq, Sk)))
        in_specs.append(pl.BlockSpec((1, Sq, Sk), lambda b: (b, 0, 0)))
    inputs += [wqkv, bqkv, wo, bo]
    in_specs += [pl.BlockSpec((D, 3 * D), lambda b: (0, 0)),
                 pl.BlockSpec((1, 3 * D), lambda b: (0, 0)),
                 pl.BlockSpec((D, D), lambda b: (0, 0)),
                 pl.BlockSpec((1, D), lambda b: (0, 0))]

    kern = functools.partial(_mha_kernel, n_heads=n_heads, use_mask=use_mask,
                             self_attn=self_attn, kv_same=kv_same)
    return pl.pallas_call(
        kern,
        out_shape=jax.ShapeDtypeStruct((B, Sq, D), query.dtype),
        grid=(B,),
        in_specs=in_specs,
        out_specs=pl.BlockSpec((1, Sq, D), lambda b: (b, 0, 0)),
        compiler_params=pltpu.CompilerParams(
            dimension_semantics=("parallel",)),
    )(*inputs)


# --------------------------- pure-JAX reference ------------------------------

def _ref_mha(query, key, value, mask, p, n_heads):
    B, Sq, D = query.shape
    Sk = key.shape[1]
    d_k = D // n_heads
    q = (query @ p["wq"] + p["bq"]).reshape(B, Sq, n_heads, d_k).transpose(0, 2, 1, 3)
    k = (key @ p["wk"] + p["bk"]).reshape(B, Sk, n_heads, d_k).transpose(0, 2, 1, 3)
    v = (value @ p["wv"] + p["bv"]).reshape(B, Sk, n_heads, d_k).transpose(0, 2, 1, 3)
    s = jnp.einsum("bhqd,bhkd->bhqk", q, k) / math.sqrt(d_k)
    if mask is not None:
        s = jnp.where(mask[:, None, :, :] == 0, -1e9, s)
    a = jax.nn.softmax(s, axis=-1)
    o = jnp.einsum("bhqk,bhkd->bhqd", a, v).transpose(0, 2, 1, 3).reshape(B, Sq, D)
    return o @ p["wo"] + p["bo"]


# --------------------------------- main ---------------------------------------

def _init_params(key, d_model):
    ks = jax.random.split(key, 8)

    def w(k, shape):
        return jax.random.normal(k, shape, jnp.float32) * 0.02

    return {"wq": w(ks[0], (d_model, d_model)), "bq": w(ks[1], (d_model,)),
            "wk": w(ks[2], (d_model, d_model)), "bk": w(ks[3], (d_model,)),
            "wv": w(ks[4], (d_model, d_model)), "bv": w(ks[5], (d_model,)),
            "wo": w(ks[6], (d_model, d_model)), "bo": w(ks[7], (d_model,))}


if __name__ == "__main__":
    B, S, d_model, n_heads = 2, 8, 32, 4

    key = jax.random.PRNGKey(0)
    kq, km, kv2, kp = jax.random.split(key, 4)
    x = jax.random.normal(kq, (B, S, d_model), jnp.float32)
    enc = jax.random.normal(km, (B, S, d_model), jnp.float32)
    enc2 = jax.random.normal(kv2, (B, S, d_model), jnp.float32)
    params = _init_params(kp, d_model)

    # Causal mask (0 = masked out), matching torch masked_fill(mask == 0, -1e9).
    causal = jnp.broadcast_to(jnp.tril(jnp.ones((S, S), jnp.float32)), (B, S, S))
    # Padding-style mask [B, 1, Sk] (broadcast over the query axis).
    pad = (jnp.arange(S)[None, :] < jnp.array([S, S - 3])[:, None]
           ).astype(jnp.float32).reshape(B, 1, S)

    # 1) self-attention with causal mask (fused-QKV fast path).
    out1 = jax.block_until_ready(
        multi_head_attention(x, x, x, causal, params, n_heads))
    ref1 = _ref_mha(x, x, x, causal, params, n_heads)
    np.testing.assert_allclose(np.asarray(out1), np.asarray(ref1),
                               rtol=2e-3, atol=2e-3)

    # 2) cross-attention (key is value -> fused KV path), mask=None.
    out2 = jax.block_until_ready(
        multi_head_attention(x, enc, enc, None, params, n_heads))
    ref2 = _ref_mha(x, enc, enc, None, params, n_heads)
    np.testing.assert_allclose(np.asarray(out2), np.asarray(ref2),
                               rtol=2e-3, atol=2e-3)

    # 3) fully general path (q/k/v all distinct) with a broadcastable pad mask.
    out3 = jax.block_until_ready(
        multi_head_attention(x, enc, enc2, pad, params, n_heads))
    ref3 = _ref_mha(x, enc, enc2, pad, params, n_heads)
    np.testing.assert_allclose(np.asarray(out3), np.asarray(ref3),
                               rtol=2e-3, atol=2e-3)

    print("KERNEL_OK")
</pallas_src>

<mosaic_0001>
module attributes {stable_mosaic.version = 11 : i64} {
  func.func @_mha_kernel(%arg0: i32, %arg1: memref<1x8x32xf32, #tpu.memory_space<vmem>>, %arg2: memref<1x8x8xf32, #tpu.memory_space<vmem>>, %arg3: memref<32x96xf32, #tpu.memory_space<vmem>>, %arg4: memref<1x96xf32, #tpu.memory_space<vmem>>, %arg5: memref<32x32xf32, #tpu.memory_space<vmem>>, %arg6: memref<1x32xf32, #tpu.memory_space<vmem>>, %arg7: memref<1x8x32xf32, #tpu.memory_space<vmem>>) attributes {dimension_semantics = [#tpu.dimension_semantics<parallel>], iteration_bounds = array<i64: 2>, scalar_prefetch = 0 : i64, scratch_operands = 0 : i64, tpu.core_type = #tpu.core_type<tc>, window_params = [{transform_indices = @transform_0, window_bounds = array<i64: 1, 8, 32>}, {transform_indices = @transform_1, window_bounds = array<i64: 1, 8, 8>}, {pipeline_mode = #tpu.pipeline_mode<synchronous>, transform_indices = @transform_2, window_bounds = array<i64: 32, 96>}, {pipeline_mode = #tpu.pipeline_mode<synchronous>, transform_indices = @transform_3, window_bounds = array<i64: 1, 96>}, {pipeline_mode = #tpu.pipeline_mode<synchronous>, transform_indices = @transform_4, window_bounds = array<i64: 32, 32>}, {pipeline_mode = #tpu.pipeline_mode<synchronous>, transform_indices = @transform_5, window_bounds = array<i64: 1, 32>}, {transform_indices = @transform_6, window_bounds = array<i64: 1, 8, 32>}]} {
    %c0 = arith.constant 0 : index
    %c0_0 = arith.constant 0 : index
    %c0_1 = arith.constant 0 : index
    %0 = vector.load %arg1[%c0, %c0_0, %c0_1] : memref<1x8x32xf32, #tpu.memory_space<vmem>>, vector<1x8x32xf32>
    %1 = vector.shape_cast %0 : vector<1x8x32xf32> to vector<8x32xf32>
    %c0_2 = arith.constant 0 : index
    %c0_3 = arith.constant 0 : index
    %2 = vector.load %arg3[%c0_2, %c0_3] : memref<32x96xf32, #tpu.memory_space<vmem>>, vector<32x96xf32>
    %cst = arith.constant dense<0.000000e+00> : vector<8x96xf32>
    %3 = tpu.matmul %1, %2, %cst {dimension_numbers = #tpu.dot_dimension_numbers<[1], [0], [0], [1], [0, 0, 1, 1], [], []>} : vector<8x32xf32>, vector<32x96xf32>, vector<8x96xf32> -> vector<8x96xf32>
    %c0_4 = arith.constant 0 : index
    %c0_5 = arith.constant 0 : index
    %4 = vector.load %arg4[%c0_4, %c0_5] : memref<1x96xf32, #tpu.memory_space<vmem>>, vector<1x96xf32>
    %5 = vector.broadcast %4 : vector<1x96xf32> to vector<8x96xf32>
    %6 = arith.addf %3, %5 : vector<8x96xf32>
    %7 = vector.extract_strided_slice %6 {offsets = [0, 0], sizes = [8, 32], strides = [1, 1]} : vector<8x96xf32> to vector<8x32xf32>
    %8 = vector.extract_strided_slice %6 {offsets = [0, 32], sizes = [8, 32], strides = [1, 1]} : vector<8x96xf32> to vector<8x32xf32>
    %9 = vector.extract_strided_slice %6 {offsets = [0, 64], sizes = [8, 32], strides = [1, 1]} : vector<8x96xf32> to vector<8x32xf32>
    %c0_6 = arith.constant 0 : index
    %c0_7 = arith.constant 0 : index
    %c0_8 = arith.constant 0 : index
    %10 = vector.load %arg2[%c0_6, %c0_7, %c0_8] : memref<1x8x8xf32, #tpu.memory_space<vmem>>, vector<1x8x8xf32>
    %11 = vector.shape_cast %10 : vector<1x8x8xf32> to vector<8x8xf32>
    %cst_9 = arith.constant 0.000000e+00 : f32
    %12 = vector.broadcast %cst_9 : f32 to vector<8x8xf32>
    %13 = arith.cmpf oeq, %11, %12 : vector<8x8xf32>
    %14 = vector.extract_strided_slice %7 {offsets = [0, 0], sizes = [8, 8], strides = [1, 1]} : vector<8x32xf32> to vector<8x8xf32>
    %15 = vector.extract_strided_slice %8 {offsets = [0, 0], sizes = [8, 8], strides = [1, 1]} : vector<8x32xf32> to vector<8x8xf32>
    %16 = vector.extract_strided_slice %9 {offsets = [0, 0], sizes = [8, 8], strides = [1, 1]} : vector<8x32xf32> to vector<8x8xf32>
    %cst_10 = arith.constant dense<0.000000e+00> : vector<8x8xf32>
    %17 = tpu.matmul %14, %15, %cst_10 {dimension_numbers = #tpu.dot_dimension_numbers<[1], [1], [0], [0], [0, 0, 1, 0], [], []>} : vector<8x8xf32>, vector<8x8xf32>, vector<8x8xf32> -> vector<8x8xf32>
    %cst_11 = arith.constant -1.000000e+09 : f32
    %18 = vector.broadcast %cst_11 : f32 to vector<8x8xf32>
    %19 = arith.select %13, %18, %17 : vector<8x8xi1>, vector<8x8xf32>
    %cst_12 = arith.constant dense<0xFF800000> : vector<8xf32>
    %20 = vector.multi_reduction <maximumf>, %19, %cst_12 [1] : vector<8x8xf32> to vector<8xf32>
    %21 = vector.shape_cast %20 : vector<8xf32> to vector<8x1xf32>
    %22 = vector.broadcast %21 : vector<8x1xf32> to vector<8x8xf32>
    %23 = arith.subf %19, %22 : vector<8x8xf32>
    %24 = math.exp %23 : vector<8x8xf32>
    %cst_13 = arith.constant dense<0.000000e+00> : vector<8xf32>
    %25 = vector.multi_reduction <add>, %24, %cst_13 [1] : vector<8x8xf32> to vector<8xf32>
    %26 = vector.shape_cast %25 : vector<8xf32> to vector<8x1xf32>
    %27 = tpu.reciprocal %26 {approx = true} : vector<8x1xf32> -> vector<8x1xf32>
    %28 = vector.broadcast %27 : vector<8x1xf32> to vector<8x8xf32>
    %29 = arith.mulf %24, %28 : vector<8x8xf32>
    %cst_14 = arith.constant dense<0.000000e+00> : vector<8x8xf32>
    %30 = tpu.matmul %29, %16, %cst_14 {dimension_numbers = #tpu.dot_dimension_numbers<[1], [0], [0], [1], [0, 0, 1, 1], [], []>} : vector<8x8xf32>, vector<8x8xf32>, vector<8x8xf32> -> vector<8x8xf32>
    %31 = vector.extract_strided_slice %7 {offsets = [0, 8], sizes = [8, 8], strides = [1, 1]} : vector<8x32xf32> to vector<8x8xf32>
    %32 = vector.extract_strided_slice %8 {offsets = [0, 8], sizes = [8, 8], strides = [1, 1]} : vector<8x32xf32> to vector<8x8xf32>
    %33 = vector.extract_strided_slice %9 {offsets = [0, 8], sizes = [8, 8], strides = [1, 1]} : vector<8x32xf32> to vector<8x8xf32>
    %cst_15 = arith.constant dense<0.000000e+00> : vector<8x8xf32>
    %34 = tpu.matmul %31, %32, %cst_15 {dimension_numbers = #tpu.dot_dimension_numbers<[1], [1], [0], [0], [0, 0, 1, 0], [], []>} : vector<8x8xf32>, vector<8x8xf32>, vector<8x8xf32> -> vector<8x8xf32>
    %cst_16 = arith.constant -1.000000e+09 : f32
    %35 = vector.broadcast %cst_16 : f32 to vector<8x8xf32>
    %36 = arith.select %13, %35, %34 : vector<8x8xi1>, vector<8x8xf32>
    %cst_17 = arith.constant dense<0xFF800000> : vector<8xf32>
    %37 = vector.multi_reduction <maximumf>, %36, %cst_17 [1] : vector<8x8xf32> to vector<8xf32>
    %38 = vector.shape_cast %37 : vector<8xf32> to vector<8x1xf32>
    %39 = vector.broadcast %38 : vector<8x1xf32> to vector<8x8xf32>
    %40 = arith.subf %36, %39 : vector<8x8xf32>
    %41 = math.exp %40 : vector<8x8xf32>
    %cst_18 = arith.constant dense<0.000000e+00> : vector<8xf32>
    %42 = vector.multi_reduction <add>, %41, %cst_18 [1] : vector<8x8xf32> to vector<8xf32>
    %43 = vector.shape_cast %42 : vector<8xf32> to vector<8x1xf32>
    %44 = tpu.reciprocal %43 {approx = true} : vector<8x1xf32> -> vector<8x1xf32>
    %45 = vector.broadcast %44 : vector<8x1xf32> to vector<8x8xf32>
    %46 = arith.mulf %41, %45 : vector<8x8xf32>
    %cst_19 = arith.constant dense<0.000000e+00> : vector<8x8xf32>
    %47 = tpu.matmul %46, %33, %cst_19 {dimension_numbers = #tpu.dot_dimension_numbers<[1], [0], [0], [1], [0, 0, 1, 1], [], []>} : vector<8x8xf32>, vector<8x8xf32>, vector<8x8xf32> -> vector<8x8xf32>
    %48 = vector.extract_strided_slice %7 {offsets = [0, 16], sizes = [8, 8], strides = [1, 1]} : vector<8x32xf32> to vector<8x8xf32>
    %49 = vector.extract_strided_slice %8 {offsets = [0, 16], sizes = [8, 8], strides = [1, 1]} : vector<8x32xf32> to vector<8x8xf32>
    %50 = vector.extract_strided_slice %9 {offsets = [0, 16], sizes = [8, 8], strides = [1, 1]} : vector<8x32xf32> to vector<8x8xf32>
    %cst_20 = arith.constant dense<0.000000e+00> : vector<8x8xf32>
    %51 = tpu.matmul %48, %49, %cst_20 {dimension_numbers = #tpu.dot_dimension_numbers<[1], [1], [0], [0], [0, 0, 1, 0], [], []>} : vector<8x8xf32>, vector<8x8xf32>, vector<8x8xf32> -> vector<8x8xf32>
    %cst_21 = arith.constant -1.000000e+09 : f32
    %52 = vector.broadcast %cst_21 : f32 to vector<8x8xf32>
    %53 = arith.select %13, %52, %51 : vector<8x8xi1>, vector<8x8xf32>
    %cst_22 = arith.constant dense<0xFF800000> : vector<8xf32>
    %54 = vector.multi_reduction <maximumf>, %53, %cst_22 [1] : vector<8x8xf32> to vector<8xf32>
    %55 = vector.shape_cast %54 : vector<8xf32> to vector<8x1xf32>
    %56 = vector.broadcast %55 : vector<8x1xf32> to vector<8x8xf32>
    %57 = arith.subf %53, %56 : vector<8x8xf32>
    %58 = math.exp %57 : vector<8x8xf32>
    %cst_23 = arith.constant dense<0.000000e+00> : vector<8xf32>
    %59 = vector.multi_reduction <add>, %58, %cst_23 [1] : vector<8x8xf32> to vector<8xf32>
    %60 = vector.shape_cast %59 : vector<8xf32> to vector<8x1xf32>
    %61 = tpu.reciprocal %60 {approx = true} : vector<8x1xf32> -> vector<8x1xf32>
    %62 = vector.broadcast %61 : vector<8x1xf32> to vector<8x8xf32>
    %63 = arith.mulf %58, %62 : vector<8x8xf32>
    %cst_24 = arith.constant dense<0.000000e+00> : vector<8x8xf32>
    %64 = tpu.matmul %63, %50, %cst_24 {dimension_numbers = #tpu.dot_dimension_numbers<[1], [0], [0], [1], [0, 0, 1, 1], [], []>} : vector<8x8xf32>, vector<8x8xf32>, vector<8x8xf32> -> vector<8x8xf32>
    %65 = vector.extract_strided_slice %7 {offsets = [0, 24], sizes = [8, 8], strides = [1, 1]} : vector<8x32xf32> to vector<8x8xf32>
    %66 = vector.extract_strided_slice %8 {offsets = [0, 24], sizes = [8, 8], strides = [1, 1]} : vector<8x32xf32> to vector<8x8xf32>
    %67 = vector.extract_strided_slice %9 {offsets = [0, 24], sizes = [8, 8], strides = [1, 1]} : vector<8x32xf32> to vector<8x8xf32>
    %cst_25 = arith.constant dense<0.000000e+00> : vector<8x8xf32>
    %68 = tpu.matmul %65, %66, %cst_25 {dimension_numbers = #tpu.dot_dimension_numbers<[1], [1], [0], [0], [0, 0, 1, 0], [], []>} : vector<8x8xf32>, vector<8x8xf32>, vector<8x8xf32> -> vector<8x8xf32>
    %cst_26 = arith.constant -1.000000e+09 : f32
    %69 = vector.broadcast %cst_26 : f32 to vector<8x8xf32>
    %70 = arith.select %13, %69, %68 : vector<8x8xi1>, vector<8x8xf32>
    %cst_27 = arith.constant dense<0xFF800000> : vector<8xf32>
    %71 = vector.multi_reduction <maximumf>, %70, %cst_27 [1] : vector<8x8xf32> to vector<8xf32>
    %72 = vector.shape_cast %71 : vector<8xf32> to vector<8x1xf32>
    %73 = vector.broadcast %72 : vector<8x1xf32> to vector<8x8xf32>
    %74 = arith.subf %70, %73 : vector<8x8xf32>
    %75 = math.exp %74 : vector<8x8xf32>
    %cst_28 = arith.constant dense<0.000000e+00> : vector<8xf32>
    %76 = vector.multi_reduction <add>, %75, %cst_28 [1] : vector<8x8xf32> to vector<8xf32>
    %77 = vector.shape_cast %76 : vector<8xf32> to vector<8x1xf32>
    %78 = tpu.reciprocal %77 {approx = true} : vector<8x1xf32> -> vector<8x1xf32>
    %79 = vector.broadcast %78 : vector<8x1xf32> to vector<8x8xf32>
    %80 = arith.mulf %75, %79 : vector<8x8xf32>
    %cst_29 = arith.constant dense<0.000000e+00> : vector<8x8xf32>
    %81 = tpu.matmul %80, %67, %cst_29 {dimension_numbers = #tpu.dot_dimension_numbers<[1], [0], [0], [1], [0, 0, 1, 1], [], []>} : vector<8x8xf32>, vector<8x8xf32>, vector<8x8xf32> -> vector<8x8xf32>
    %82 = tpu.concatenate %30, %47, %64, %81 in 1 : vector<8x8xf32>, vector<8x8xf32>, vector<8x8xf32>, vector<8x8xf32> -> vector<8x32xf32>
    %c0_30 = arith.constant 0 : index
    %c0_31 = arith.constant 0 : index
    %83 = vector.load %arg5[%c0_30, %c0_31] : memref<32x32xf32, #tpu.memory_space<vmem>>, vector<32x32xf32>
    %cst_32 = arith.constant dense<0.000000e+00> : vector<8x32xf32>
    %84 = tpu.matmul %82, %83, %cst_32 {dimension_numbers = #tpu.dot_dimension_numbers<[1], [0], [0], [1], [0, 0, 1, 1], [], []>} : vector<8x32xf32>, vector<32x32xf32>, vector<8x32xf32> -> vector<8x32xf32>
    %c0_33 = arith.constant 0 : index
    %c0_34 = arith.constant 0 : index
    %85 = vector.load %arg6[%c0_33, %c0_34] : memref<1x32xf32, #tpu.memory_space<vmem>>, vector<1x32xf32>
    %86 = vector.broadcast %85 : vector<1x32xf32> to vector<8x32xf32>
    %87 = arith.addf %84, %86 : vector<8x32xf32>
    %c0_35 = arith.constant 0 : index
    %c0_36 = arith.constant 0 : index
    %c0_37 = arith.constant 0 : index
    %88 = vector.load %arg7[%c0_35, %c0_36, %c0_37] : memref<1x8x32xf32, #tpu.memory_space<vmem>>, vector<1x8x32xf32>
    %89 = vector.shape_cast %88 : vector<1x8x32xf32> to vector<8x32xf32>
    %90 = vector.shape_cast %87 : vector<8x32xf32> to vector<1x8x32xf32>
    tpu.vector_store %arg7[%c0_35, %c0_36, %c0_37], %90 {strides = array<i32>} : memref<1x8x32xf32, #tpu.memory_space<vmem>>, vector<1x8x32xf32>,
    return
  }
  func.func @transform_0(%arg0: i32) -> (i32, i32, i32) {
    %c0_i32 = arith.constant 0 : i32
    %c0_i32_0 = arith.constant 0 : i32
    %c0_i32_1 = arith.constant 0 : i32
    return %arg0, %c0_i32, %c0_i32_0 : i32, i32, i32
  }
  func.func @transform_1(%arg0: i32) -> (i32, i32, i32) {
    %c0_i32 = arith.constant 0 : i32
    %c0_i32_0 = arith.constant 0 : i32
    %c0_i32_1 = arith.constant 0 : i32
    return %arg0, %c0_i32, %c0_i32_0 : i32, i32, i32
  }
  func.func @transform_2(%arg0: i32) -> (i32, i32) {
    %c0_i32 = arith.constant 0 : i32
    %c0_i32_0 = arith.constant 0 : i32
    %c0_i32_1 = arith.constant 0 : i32
    return %c0_i32, %c0_i32_0 : i32, i32
  }
  func.func @transform_3(%arg0: i32) -> (i32, i32) {
    %c0_i32 = arith.constant 0 : i32
    %c0_i32_0 = arith.constant 0 : i32
    %c0_i32_1 = arith.constant 0 : i32
    return %c0_i32, %c0_i32_0 : i32, i32
  }
  func.func @transform_4(%arg0: i32) -> (i32, i32) {
    %c0_i32 = arith.constant 0 : i32
    %c0_i32_0 = arith.constant 0 : i32
    %c0_i32_1 = arith.constant 0 : i32
    return %c0_i32, %c0_i32_0 : i32, i32
  }
  func.func @transform_5(%arg0: i32) -> (i32, i32) {
    %c0_i32 = arith.constant 0 : i32
    %c0_i32_0 = arith.constant 0 : i32
    %c0_i32_1 = arith.constant 0 : i32
    return %c0_i32, %c0_i32_0 : i32, i32
  }
  func.func @transform_6(%arg0: i32) -> (i32, i32, i32) {
    %c0_i32 = arith.constant 0 : i32
    %c0_i32_0 = arith.constant 0 : i32
    %c0_i32_1 = arith.constant 0 : i32
    return %arg0, %c0_i32, %c0_i32_0 : i32, i32, i32
  }
}

</mosaic_0001>

<llo_original>
// kernel: tpu_custom_call.1
$region0: #{tpu_custom_call.1}
  #allocation0 [shape = 'u32[]', space=smem, size = 0x4, offset = 0x4, fixed_abs, tag = 'smem constant byte address 0x4 - core index']
  #allocation1 [shape = 'u32[72,128]{1,0:T(1,128)}', space=vmem, size = 0x9000, scoped, tag = 'internal scratch']
  %s0 = inlined_call_operand.hbm [shape: f32[2,8,32], index: 0, kind: input, shape index: {}]
  %s1 = inlined_call_operand.hbm [shape: f32[2,8,8], index: 1, kind: input, shape index: {}]
  %s2 = inlined_call_operand.hbm [shape: f32[32,96], index: 2, kind: input, shape index: {}]
  %s3 = inlined_call_operand.vmem [shape: f32[1,96], index: 3, kind: input, shape index: {}]
  %s4 = inlined_call_operand.hbm [shape: f32[32,32], index: 4, kind: input, shape index: {}]
  %s5 = inlined_call_operand.vmem [shape: f32[1,32], index: 5, kind: input, shape index: {}]
  %s6 = inlined_call_operand.hbm [shape: f32[2,8,32], index: 6, kind: output, shape index: {}]
  %s7 = sld [smem:[#allocation0]]
  $region73: #{tpu_custom_call.1} parent=0
    _
  %s9 = ssub.s32 1, %s7
  %s10 = scalar_select 0, %s9, %s7
  $region1: #{tpu_custom_call.1} parent=0
    #allocation2 [shape = 'u8[8192]{0}', space=vmem, size = 0x2000, scoped, tag = 'input window, operand 0']
    #allocation3 [shape = 's32[2]{0}', space=sflag, size = 0x8, scoped, tag = 'scoped memory for tpu_custom_call.1']
    #allocation4 [shape = 's32[2]{0}', space=sflag, size = 0x8, scoped, tag = 'scoped memory for tpu_custom_call.1']
    #allocation5 [shape = 'u8[8192]{0}', space=vmem, size = 0x2000, scoped, tag = 'input window, operand 1']
    #allocation6 [shape = 's32[2]{0}', space=sflag, size = 0x8, scoped, tag = 'scoped memory for tpu_custom_call.1']
    #allocation7 [shape = 'u8[16384]{0}', space=vmem, size = 0x4000, scoped, tag = 'input window, operand 2, single buffered']
    #allocation8 [shape = 'u8[16384]{0}', space=vmem, size = 0x4000, scoped, tag = 'input window, operand 4, single buffered']
    #allocation9 [shape = 's32[1]{0}', space=sflag, size = 0x4, scoped, tag = 'scoped memory for tpu_custom_call.1']
    #allocation10 [shape = 'u8[8192]{0}', space=vmem, size = 0x2000, scoped, tag = 'output window, operand 0']
    %11 = vsyncpa [#allocation3], 0
    %s12 = scalar_lea.sflag [#allocation3], 1
    %13 = vsyncpa %s12, 0
    %14 = vsyncpa [#allocation6], 0
    %s15 = scalar_lea.sflag [#allocation6], 1
    %16 = vsyncpa %s15, 0
    %17 = vsyncpa [#allocation9], 0
    %18 = vsyncpa [#allocation4], 0
    %s19 = scalar_lea.sflag [#allocation4], 1
    %20 = vsyncpa %s19, 0
    loop: start=0, step=1, limit=4
    $region2: #{tpu_custom_call.1} parent=1 // loop_pre_header
      _
    $region3: #{tpu_custom_call.1} parent=1 // loop_header
      %s22 = sphi 0, %s26
      %p23 = scmp.ge.s32.totalorder %s22, 4
      %s32 = sphi 0, %s34
      %s35 = sphi 0, %s32
      %s36 = sphi 0, %s35
      %s52 = sphi 0, %s36
      %s58 = sphi 0, %s60
      %s61 = sphi 0, %s58
      %s62 = sphi 0, %s61
      %s78 = sphi 0, %s62
      %s82 = sphi 0, %s82
      %s84 = sphi 0, %s82
      %s85 = sphi 0, %s84
      %s99 = sphi 0, %s85
      %s103 = sphi 0, %s103
      %s105 = sphi 0, %s103
      %s106 = sphi 0, %s105
      %s120 = sphi 0, %s106
      %s124 = sphi 0, %s124
      %s126 = sphi 0, %s124
      %s127 = sphi 0, %s126
      %s141 = sphi 0, %s127
      %s145 = sphi 0, %s145
      %s147 = sphi 0, %s145
      %s148 = sphi 0, %s147
      %s162 = sphi 0, %s148
      %s168 = sphi 0, %s170
      %s171 = sphi 0, %s168
      %s172 = sphi 0, %s171
      %s188 = sphi 0, %s172
    $region4: #{tpu_custom_call.1} parent=1 // loop_header_branch
      %25 = sbr.rel (%p23) target = $region8
    $region5: #{tpu_custom_call.1} parent=1 // loop_body
      %s27 = ssub.s32 %s22, 1
      %s28 = ssub.s32 %s22, 2
      %s29 = sadd.s32 %s22, 1
      %s30 = ssub.s32 %s22, %s29
      %p31 = scmp.eq.s32.totalorder %s30, 0
      %s33 = sadd.s32 %s32, 1
      %s34 = scalar_select %p31, %s32, %s33
      %p37 = pneg %p31
      %p38 = scmp.eq.s32.totalorder %s22, 1
      %p39 = por %p37, %p38
      %p40 = scmp.ne.s32.totalorder %s32, %s35
      %p41 = scmp.eq.s32.totalorder %s22, 0
      %p42 = por %p40, %p41
      %p43 = scmp.ne.s32.totalorder %s32, %s35
      %p44 = scmp.eq.s32.totalorder %s27, 1
      %p45 = por %p43, %p44
      %p46 = scmp.ne.s32.totalorder %s35, %s36
      %p47 = scmp.eq.s32.totalorder %s27, 0
      %p48 = por %p46, %p47
      %p49 = scmp.ne.s32.totalorder %s35, %s36
      %p50 = scmp.eq.s32.totalorder %s28, 1
      %p51 = por %p49, %p50
      %p53 = scmp.ne.s32.totalorder %s36, %s52
      %p54 = scmp.eq.s32.totalorder %s28, 0
      %p55 = por %p53, %p54
      %s56 = ssub.s32 %s22, %s29
      %p57 = scmp.eq.s32.totalorder %s56, 0
      %s59 = sadd.s32 %s58, 1
      %s60 = scalar_select %p57, %s58, %s59
      %p63 = pneg %p57
      %p64 = scmp.eq.s32.totalorder %s22, 1
      %p65 = por %p63, %p64
      %p66 = scmp.ne.s32.totalorder %s58, %s61
      %p67 = scmp.eq.s32.totalorder %s22, 0
      %p68 = por %p66, %p67
      %p69 = scmp.ne.s32.totalorder %s58, %s61
      %p70 = scmp.eq.s32.totalorder %s27, 1
      %p71 = por %p69, %p70
      %p72 = scmp.ne.s32.totalorder %s61, %s62
      %p73 = scmp.eq.s32.totalorder %s27, 0
      %p74 = por %p72, %p73
      %p75 = scmp.ne.s32.totalorder %s61, %s62
      %p76 = scmp.eq.s32.totalorder %s28, 1
      %p77 = por %p75, %p76
      %p79 = scmp.ne.s32.totalorder %s62, %s78
      %p80 = scmp.eq.s32.totalorder %s28, 0
      %p81 = por %p79, %p80
      %s83 = sadd.s32 %s82, 1
      %p86 = scmp.eq.s32.totalorder %s22, 1
      %p87 = scmp.ne.s32.totalorder %s82, %s84
      %p88 = scmp.eq.s32.totalorder %s22, 0
      %p89 = por %p87, %p88
      %p90 = scmp.ne.s32.totalorder %s82, %s84
      %p91 = scmp.eq.s32.totalorder %s27, 1
      %p92 = por %p90, %p91
      %p93 = scmp.ne.s32.totalorder %s84, %s85
      %p94 = scmp.eq.s32.totalorder %s27, 0
      %p95 = por %p93, %p94
      %p96 = scmp.ne.s32.totalorder %s84, %s85
      %p97 = scmp.eq.s32.totalorder %s28, 1
      %p98 = por %p96, %p97
      %p100 = scmp.ne.s32.totalorder %s85, %s99
      %p101 = scmp.eq.s32.totalorder %s28, 0
      %p102 = por %p100, %p101
      %s104 = sadd.s32 %s103, 1
      %p107 = scmp.eq.s32.totalorder %s22, 1
      %p108 = scmp.ne.s32.totalorder %s103, %s105
      %p109 = scmp.eq.s32.totalorder %s22, 0
      %p110 = por %p108, %p109
      %p111 = scmp.ne.s32.totalorder %s103, %s105
      %p112 = scmp.eq.s32.totalorder %s27, 1
      %p113 = por %p111, %p112
      %p114 = scmp.ne.s32.totalorder %s105, %s106
      %p115 = scmp.eq.s32.totalorder %s27, 0
      %p116 = por %p114, %p115
      %p117 = scmp.ne.s32.totalorder %s105, %s106
      %p118 = scmp.eq.s32.totalorder %s28, 1
      %p119 = por %p117, %p118
      %p121 = scmp.ne.s32.totalorder %s106, %s120
      %p122 = scmp.eq.s32.totalorder %s28, 0
      %p123 = por %p121, %p122
      %s125 = sadd.s32 %s124, 1
      %p128 = scmp.eq.s32.totalorder %s22, 1
      %p129 = scmp.ne.s32.totalorder %s124, %s126
      %p130 = scmp.eq.s32.totalorder %s22, 0
      %p131 = por %p129, %p130
      %p132 = scmp.ne.s32.totalorder %s124, %s126
      %p133 = scmp.eq.s32.totalorder %s27, 1
      %p134 = por %p132, %p133
      %p135 = scmp.ne.s32.totalorder %s126, %s127
      %p136 = scmp.eq.s32.totalorder %s27, 0
      %p137 = por %p135, %p136
      %p138 = scmp.ne.s32.totalorder %s126, %s127
      %p139 = scmp.eq.s32.totalorder %s28, 1
      %p140 = por %p138, %p139
      %p142 = scmp.ne.s32.totalorder %s127, %s141
      %p143 = scmp.eq.s32.totalorder %s28, 0
      %p144 = por %p142, %p143
      %s146 = sadd.s32 %s145, 1
      %p149 = scmp.eq.s32.totalorder %s22, 1
      %p150 = scmp.ne.s32.totalorder %s145, %s147
      %p151 = scmp.eq.s32.totalorder %s22, 0
      %p152 = por %p150, %p151
      %p153 = scmp.ne.s32.totalorder %s145, %s147
      %p154 = scmp.eq.s32.totalorder %s27, 1
      %p155 = por %p153, %p154
      %p156 = scmp.ne.s32.totalorder %s147, %s148
      %p157 = scmp.eq.s32.totalorder %s27, 0
      %p158 = por %p156, %p157
      %p159 = scmp.ne.s32.totalorder %s147, %s148
      %p160 = scmp.eq.s32.totalorder %s28, 1
      %p161 = por %p159, %p160
      %p163 = scmp.ne.s32.totalorder %s148, %s162
      %p164 = scmp.eq.s32.totalorder %s28, 0
      %p165 = por %p163, %p164
      %s166 = ssub.s32 %s22, %s29
      %p167 = scmp.eq.s32.totalorder %s166, 0
      %s169 = sadd.s32 %s168, 1
      %s170 = scalar_select %p167, %s168, %s169
      %p173 = pneg %p167
      %p174 = scmp.eq.s32.totalorder %s22, 1
      %p175 = por %p173, %p174
      %p176 = scmp.ne.s32.totalorder %s168, %s171
      %p177 = scmp.eq.s32.totalorder %s22, 0
      %p178 = por %p176, %p177
      %p179 = scmp.ne.s32.totalorder %s168, %s171
      %p180 = scmp.eq.s32.totalorder %s27, 1
      %p181 = por %p179, %p180
      %p182 = scmp.ne.s32.totalorder %s171, %s172
      %p183 = scmp.eq.s32.totalorder %s27, 0
      %p184 = por %p182, %p183
      %p185 = scmp.ne.s32.totalorder %s171, %s172
      %p186 = scmp.eq.s32.totalorder %s28, 1
      %p187 = por %p185, %p186
      %p189 = scmp.ne.s32.totalorder %s172, %s188
      %p190 = scmp.eq.s32.totalorder %s28, 0
      %p191 = por %p189, %p190
      %p192 = scmp.le.s32.totalorder 1, %s22
      %p193 = scmp.lt.s32.totalorder %s22, 3
      %p194 = pnand %p192, %p193
      %p195 = pneg %p194
      // Predicated region
      $region9: #{tpu_custom_call.1} parent=5 // pred_check
        _
      $region10: #{tpu_custom_call.1} parent=5 // pred_check_branch
        %197 = sbr.rel (%p194) target = $region12
      $region11: #{tpu_custom_call.1} parent=5 // pred_region
        %s198 = ssub.s32 %s22, 1
        // Predicated region
        $region13: #{tpu_custom_call.1} parent=11 // pred_check
          %p199 = pneg %p95
        $region14: #{tpu_custom_call.1} parent=11 // pred_check_branch
          %201 = sbr.rel (%p199) target = $region16
        $region15: #{tpu_custom_call.1} parent=11 // pred_region
          %203 = vsyncadd [#allocation6], 0
          %s204 = sshll.u32 %s2, 4
          %s205 = int_to_ptr.hbm [resolvable:$true] %s204
          %s206 = sshll.u32 [#allocation7], 4
          %s207 = int_to_ptr.vmem [resolvable:$true] %s206
          %212 = dma.hbm_to_vmem [thread:$0]  %s205, 512, %s207, [#allocation6], 128, 128, 8
        $region16: #{tpu_custom_call.1} parent=11 // pred_fallthru
          _
        // Predicated region
        $region17: #{tpu_custom_call.1} parent=11 // pred_check
          %p213 = pneg %p116
        $region18: #{tpu_custom_call.1} parent=11 // pred_check_branch
          %215 = sbr.rel (%p213) target = $region20
        $region19: #{tpu_custom_call.1} parent=11 // pred_region
          _
        $region20: #{tpu_custom_call.1} parent=11 // pred_fallthru
          _
        // Predicated region
        $region21: #{tpu_custom_call.1} parent=11 // pred_check
          %p216 = pneg %p137
        $region22: #{tpu_custom_call.1} parent=11 // pred_check_branch
          %218 = sbr.rel (%p216) target = $region24
        $region23: #{tpu_custom_call.1} parent=11 // pred_region
          %220 = vsyncadd [#allocation9], 0
          %s221 = sshll.u32 %s4, 4
          %s222 = int_to_ptr.hbm [resolvable:$true] %s221
          %s223 = sshll.u32 [#allocation8], 4
          %s224 = int_to_ptr.vmem [resolvable:$true] %s223
          %229 = dma.hbm_to_vmem [thread:$0]  %s222, 512, %s224, [#allocation9], 128, 128, 8
        $region24: #{tpu_custom_call.1} parent=11 // pred_fallthru
          _
        // Predicated region
        $region25: #{tpu_custom_call.1} parent=11 // pred_check
          %p230 = pneg %p158
        $region26: #{tpu_custom_call.1} parent=11 // pred_check_branch
          %232 = sbr.rel (%p230) target = $region28
        $region27: #{tpu_custom_call.1} parent=11 // pred_region
          _
        $region28: #{tpu_custom_call.1} parent=11 // pred_fallthru
          _
      $region12: #{tpu_custom_call.1} parent=5 // pred_fallthru
        _
      %p233 = scmp.lt.s32.totalorder %s22, 2
      // Predicated region
      $region29: #{tpu_custom_call.1} parent=5 // pred_check
        %p234 = pneg %p233
      $region30: #{tpu_custom_call.1} parent=5 // pred_check_branch
        %236 = sbr.rel (%p234) target = $region32
      $region31: #{tpu_custom_call.1} parent=5 // pred_region
        // Predicated region
        $region33: #{tpu_custom_call.1} parent=31 // pred_check
          %p237 = pneg %p42
        $region34: #{tpu_custom_call.1} parent=31 // pred_check_branch
          %239 = sbr.rel (%p237) target = $region36
        $region35: #{tpu_custom_call.1} parent=31 // pred_region
          %s240 = sand.u32 %s32, 1
          %s241 = scalar_lea.sflag [#allocation3], %s240
          %s242 = sand.u32 %s32, 1
          %s243 = smul.addr %s242, 8
          %s244 = scalar_lea.vmem [#allocation2], %s243
          %246 = vsyncadd %s241, 0
          %s247 = smul.addr %s22, 8
          %s248 = scalar_lea.hbm %s0, %s247
          %s250 = sshll.u32 %s248, 4
          %s251 = int_to_ptr.hbm [resolvable:$true] %s250
          %s252 = sshll.u32 %s244, 4
          %s253 = int_to_ptr.vmem [resolvable:$true] %s252
          %255 = dma.hbm_to_vmem [thread:$0]  %s251, 128, %s253, %s241
        $region36: #{tpu_custom_call.1} parent=31 // pred_fallthru
          _
        // Predicated region
        $region37: #{tpu_custom_call.1} parent=31 // pred_check
          %p256 = pneg %p68
        $region38: #{tpu_custom_call.1} parent=31 // pred_check_branch
          %258 = sbr.rel (%p256) target = $region40
        $region39: #{tpu_custom_call.1} parent=31 // pred_region
          %s259 = sand.u32 %s22, 1
          %s260 = scalar_lea.sflag [#allocation6], %s259
          %s261 = sand.u32 %s58, 1
          %s262 = smul.addr %s261, 8
          %s263 = scalar_lea.vmem [#allocation5], %s262
          %265 = vsyncadd %s260, 0
          %s266 = smul.addr %s22, 8
          %s267 = scalar_lea.hbm %s1, %s266
          %s269 = sshll.u32 %s267, 4
          %s270 = int_to_ptr.hbm [resolvable:$true] %s269
          %s271 = sshll.u32 %s263, 4
          %s272 = int_to_ptr.vmem [resolvable:$true] %s271
          %274 = dma.hbm_to_vmem [thread:$0]  %s270, 128, %s272, %s260
        $region40: #{tpu_custom_call.1} parent=31 // pred_fallthru
          _
      $region32: #{tpu_custom_call.1} parent=5 // pred_fallthru
        _
      %p275 = scmp.le.s32.totalorder 1, %s22
      %p276 = scmp.lt.s32.totalorder %s22, 3
      %p277 = pnand %p275, %p276
      %p278 = pneg %p277
      // Predicated region
      $region41: #{tpu_custom_call.1} parent=5 // pred_check
        _
      $region42: #{tpu_custom_call.1} parent=5 // pred_check_branch
        %280 = sbr.rel (%p277) target = $region44
      $region43: #{tpu_custom_call.1} parent=5 // pred_region
        %s281 = ssub.s32 %s22, 1
        %s282 = sand.u32 %s35, 1
        %s283 = scalar_lea.sflag [#allocation3], %s282
        %s284 = sand.u32 %s35, 1
        %s285 = smul.addr %s284, 8
        %s286 = scalar_lea.vmem [#allocation2], %s285
        // Predicated region
        $region45: #{tpu_custom_call.1} parent=43 // pred_check
          %p287 = pneg %p48
        $region46: #{tpu_custom_call.1} parent=43 // pred_check_branch
          %289 = sbr.rel (%p287) target = $region48
        $region47: #{tpu_custom_call.1} parent=43 // pred_region
          %291 = dma.done %s283, 128
        $region48: #{tpu_custom_call.1} parent=43 // pred_fallthru
          _
        %s292 = sand.u32 %s27, 1
        %s293 = scalar_lea.sflag [#allocation6], %s292
        %s294 = sand.u32 %s61, 1
        %s295 = smul.addr %s294, 8
        %s296 = scalar_lea.vmem [#allocation5], %s295
        // Predicated region
        $region49: #{tpu_custom_call.1} parent=43 // pred_check
          %p297 = pneg %p74
        $region50: #{tpu_custom_call.1} parent=43 // pred_check_branch
          %299 = sbr.rel (%p297) target = $region52
        $region51: #{tpu_custom_call.1} parent=43 // pred_region
          %301 = dma.done %s293, 128
        $region52: #{tpu_custom_call.1} parent=43 // pred_fallthru
          _
        // Predicated region
        $region53: #{tpu_custom_call.1} parent=43 // pred_check
          %p302 = pneg %p95
        $region54: #{tpu_custom_call.1} parent=43 // pred_check_branch
          %304 = sbr.rel (%p302) target = $region56
        $region55: #{tpu_custom_call.1} parent=43 // pred_region
          %306 = dma.done [#allocation6], 512
        $region56: #{tpu_custom_call.1} parent=43 // pred_fallthru
          _
        // Predicated region
        $region57: #{tpu_custom_call.1} parent=43 // pred_check
          %p307 = pneg %p137
        $region58: #{tpu_custom_call.1} parent=43 // pred_check_branch
          %309 = sbr.rel (%p307) target = $region60
        $region59: #{tpu_custom_call.1} parent=43 // pred_region
          %311 = dma.done [#allocation9], 512
        $region60: #{tpu_custom_call.1} parent=43 // pred_fallthru
          _
        %s312 = sand.u32 %s35, 1
        %s313 = scalar_lea.sflag [#allocation3], %s312
        %s314 = sand.u32 %s35, 1
        %s315 = smul.addr %s314, 8
        %s316 = scalar_lea.vmem [#allocation2], %s315
        %p317 = pneg %p48
        %p318 = pneg %p45
        %s319 = sand.u32 %s27, 1
        %s320 = scalar_lea.sflag [#allocation6], %s319
        %s321 = sand.u32 %s61, 1
        %s322 = smul.addr %s321, 8
        %s323 = scalar_lea.vmem [#allocation5], %s322
        %p324 = pneg %p74
        %p325 = pneg %p71
        %p326 = pneg %p95
        %p327 = pneg %p92
        %p328 = pneg %p116
        %p329 = pneg %p113
        %p330 = pneg %p137
        %p331 = pneg %p134
        %p332 = pneg %p158
        %p333 = pneg %p155
        %p334 = pneg %p184
        %p335 = pneg %p181
        %s336 = sand.u32 %s171, 1
        %s337 = scalar_lea.sflag [#allocation4], %s336
        %s338 = sand.u32 %s171, 1
        %s339 = smul.addr %s338, 8
        %s340 = scalar_lea.vmem [#allocation10], %s339
        %v341 = vld [vmem:[%s286] sm:$0xff]
        %v342 = vld [vmem:[#allocation7] sm:$0xff]
        %v343 = vld [vmem:[#allocation7 + $0x8] sm:$0xff]
        %v344 = vld [vmem:[#allocation7 + $0x10] sm:$0xff]
        %v345 = vld [vmem:[#allocation7 + $0x18] sm:$0xff]
        %v346 = vld [vmem:[%s3] sm:$0x1]
        %v348 = vperm.slane %v346, 0
        %vm350 = vcmask 261120
        %v352 = vsel %vm350, %v341, 0
        %354 = vmatpush.msra.mxu0 0.0
        %355 = vmatpush.msra.mxu0 0.0
        %356 = vmatpush.msra.mxu0 0.0
        %357 = vmatpush.msra.mxu0 0.0
        %358 = vmatpush.msra.mxu0 0.0
        %359 = vmatpush.msra.mxu0 0.0
        %360 = vmatpush.msra.mxu0 0.0
        %361 = vmatpush.msra.mxu0 0.0
        %362 = vmatpush.msra.mxu0 0.0
        %363 = vmatpush.msra.mxu0 0.0
        %364 = vmatpush.msra.mxu0 0.0
        %365 = vmatpush.msra.mxu0 0.0
        %366 = vmatpush.msra.mxu0 %v345
        %367 = vmatpush.msra.mxu0 %v344
        %368 = vmatpush.msra.mxu0 %v343
        %369 = vmatpush.msra.mxu0 %v342
        %370 = vmatmul.f32.gmra.mxu0 %v352
        %v371 = vpop.f32.mrf.mxu0
        %v372 = vadd.f32 %v348, %v371
        %373 = vdwg.mxu0
        %v374 = vld [vmem:[%s296] sm:$0xff]
        %vm375 = vcmp.eq.f32.partialorder %v374, 0.0
        %377 = vrot.lane.b32.xlu0 %v372, 96
        %v378 = vpop.permute.xlu0 %377
        %vm379 = vcmask 64512
        %v380 = vsel %vm379, %v372, 0
        %v382 = vsel %vm379, %v378, 0
        %384 = vmatpush.xpose.msra.mxu0 0.0
        %385 = vmatpush.xpose.msra.mxu0 0.0
        %386 = vmatpush.xpose.msra.mxu0 0.0
        %387 = vmatpush.xpose.msra.mxu0 0.0
        %388 = vmatpush.xpose.msra.mxu0 0.0
        %389 = vmatpush.xpose.msra.mxu0 0.0
        %390 = vmatpush.xpose.msra.mxu0 0.0
        %391 = vmatpush.xpose.msra.mxu0 0.0
        %392 = vmatpush.xpose.msra.mxu0 0.0
        %393 = vmatpush.xpose.msra.mxu0 0.0
        %394 = vmatpush.xpose.msra.mxu0 0.0
        %395 = vmatpush.xpose.msra.mxu0 0.0
        %396 = vmatpush.xpose.msra.mxu0 0.0
        %397 = vmatpush.xpose.msra.mxu0 0.0
        %398 = vmatpush.xpose.msra.mxu0 0.0
        %399 = vmatpush.xpose.msra.mxu0 %v382
        %400 = vmatmul.f32.gmra.mxu0 %v380
        %v401 = vpop.f32.mrf.mxu0
        %v402 = vadd.f32 0.0, %v401
        %403 = vdwg.mxu0
        %v404 = vsel %vm375, -1e+09, %v402
        %v405 = vsel %vm379, %v404, -inf
        %406 = vmax.xlane.f32.xlu0 %v405
        %v407 = vpop.xlane.xlu0 %406
        %v408 = vsub.f32 %v404, %v407
        %v409 = vmul.f32 %v408, 1.442695
        %v410 = vpow.pop %v409
        %v411 = vsel %vm379, %v410, 0.0
        %412 = vadd.xlane.f32.xlu0 %v411
        %v413 = vpop.xlane.xlu0 %412
        %v414 = vrcp.pop %v413
        %v415 = vmul.f32 %v410, %v414
        %416 = vrot.lane.b32.xlu0 %v372, 64
        %v417 = vpop.permute.xlu0 %416
        %v420 = vsel %vm379, %v415, 0
        %422 = vmatpush.msra.mxu0 0.0
        %423 = vmatpush.msra.mxu0 0.0
        %424 = vmatpush.msra.mxu0 0.0
        %425 = vmatpush.msra.mxu0 0.0
        %426 = vmatpush.msra.mxu0 0.0
        %427 = vmatpush.msra.mxu0 0.0
        %428 = vmatpush.msra.mxu0 0.0
        %429 = vmatpush.msra.mxu0 0.0
        %430 = vmatpush.msra.mxu0 0.0
        %431 = vmatpush.msra.mxu0 0.0
        %432 = vmatpush.msra.mxu0 0.0
        %433 = vmatpush.msra.mxu0 0.0
        %434 = vmatpush.msra.mxu0 0.0
        %435 = vmatpush.msra.mxu0 0.0
        %436 = vmatpush.msra.mxu0 0.0
        %437 = vmatpush.msra.mxu0 %v417
        %438 = vmatmul.f32.gmra.mxu0 %v420
        %v439 = vpop.f32.mrf.mxu0
        %v440 = vadd.f32 0.0, %v439
        %441 = vdwg.mxu0
        %442 = vrot.lane.b32.xlu0 %v372, 120
        %v443 = vpop.permute.xlu0 %442
        %444 = vrot.lane.b32.xlu0 %v372, 88
        %v445 = vpop.permute.xlu0 %444
        %v446 = vsel %vm379, %v443, 0
        %v448 = vsel %vm379, %v445, 0
        %450 = vmatpush.xpose.msra.mxu0 0.0
        %451 = vmatpush.xpose.msra.mxu0 0.0
        %452 = vmatpush.xpose.msra.mxu0 0.0
        %453 = vmatpush.xpose.msra.mxu0 0.0
        %454 = vmatpush.xpose.msra.mxu0 0.0
        %455 = vmatpush.xpose.msra.mxu0 0.0
        %456 = vmatpush.xpose.msra.mxu0 0.0
        %457 = vmatpush.xpose.msra.mxu0 0.0
        %458 = vmatpush.xpose.msra.mxu0 0.0
        %459 = vmatpush.xpose.msra.mxu0 0.0
        %460 = vmatpush.xpose.msra.mxu0 0.0
        %461 = vmatpush.xpose.msra.mxu0 0.0
        %462 = vmatpush.xpose.msra.mxu0 0.0
        %463 = vmatpush.xpose.msra.mxu0 0.0
        %464 = vmatpush.xpose.msra.mxu0 0.0
        %465 = vmatpush.xpose.msra.mxu0 %v448
        %466 = vmatmul.f32.gmra.mxu0 %v446
        %v467 = vpop.f32.mrf.mxu0
        %v468 = vadd.f32 0.0, %v467
        %469 = vdwg.mxu0
        %v470 = vsel %vm375, -1e+09, %v468
        %v471 = vsel %vm379, %v470, -inf
        %472 = vmax.xlane.f32.xlu0 %v471
        %v473 = vpop.xlane.xlu0 %472
        %v474 = vsub.f32 %v470, %v473
        %v475 = vmul.f32 %v474, 1.442695
        %v476 = vpow.pop %v475
        %v477 = vsel %vm379, %v476, 0.0
        %478 = vadd.xlane.f32.xlu0 %v477
        %v479 = vpop.xlane.xlu0 %478
        %v480 = vrcp.pop %v479
        %v481 = vmul.f32 %v476, %v480
        %482 = vrot.lane.b32.xlu0 %v372, 56
        %v483 = vpop.permute.xlu0 %482
        %v486 = vsel %vm379, %v481, 0
        %488 = vmatpush.msra.mxu0 0.0
        %489 = vmatpush.msra.mxu0 0.0
        %490 = vmatpush.msra.mxu0 0.0
        %491 = vmatpush.msra.mxu0 0.0
        %492 = vmatpush.msra.mxu0 0.0
        %493 = vmatpush.msra.mxu0 0.0
        %494 = vmatpush.msra.mxu0 0.0
        %495 = vmatpush.msra.mxu0 0.0
        %496 = vmatpush.msra.mxu0 0.0
        %497 = vmatpush.msra.mxu0 0.0
        %498 = vmatpush.msra.mxu0 0.0
        %499 = vmatpush.msra.mxu0 0.0
        %500 = vmatpush.msra.mxu0 0.0
        %501 = vmatpush.msra.mxu0 0.0
        %502 = vmatpush.msra.mxu0 0.0
        %503 = vmatpush.msra.mxu0 %v483
        %504 = vmatmul.f32.gmra.mxu0 %v486
        %v505 = vpop.f32.mrf.mxu0
        %v506 = vadd.f32 0.0, %v505
        %507 = vdwg.mxu0
        %508 = vrot.lane.b32.xlu0 %v372, 112
        %v509 = vpop.permute.xlu0 %508
        %510 = vrot.lane.b32.xlu0 %v372, 80
        %v511 = vpop.permute.xlu0 %510
        %v512 = vsel %vm379, %v509, 0
        %v514 = vsel %vm379, %v511, 0
        %516 = vmatpush.xpose.msra.mxu0 0.0
        %517 = vmatpush.xpose.msra.mxu0 0.0
        %518 = vmatpush.xpose.msra.mxu0 0.0
        %519 = vmatpush.xpose.msra.mxu0 0.0
        %520 = vmatpush.xpose.msra.mxu0 0.0
        %521 = vmatpush.xpose.msra.mxu0 0.0
        %522 = vmatpush.xpose.msra.mxu0 0.0
        %523 = vmatpush.xpose.msra.mxu0 0.0
        %524 = vmatpush.xpose.msra.mxu0 0.0
        %525 = vmatpush.xpose.msra.mxu0 0.0
        %526 = vmatpush.xpose.msra.mxu0 0.0
        %527 = vmatpush.xpose.msra.mxu0 0.0
        %528 = vmatpush.xpose.msra.mxu0 0.0
        %529 = vmatpush.xpose.msra.mxu0 0.0
        %530 = vmatpush.xpose.msra.mxu0 0.0
        %531 = vmatpush.xpose.msra.mxu0 %v514
        %532 = vmatmul.f32.gmra.mxu0 %v512
        %v533 = vpop.f32.mrf.mxu0
        %v534 = vadd.f32 0.0, %v533
        %535 = vdwg.mxu0
        %v536 = vsel %vm375, -1e+09, %v534
        %v537 = vsel %vm379, %v536, -inf
        %538 = vmax.xlane.f32.xlu0 %v537
        %v539 = vpop.xlane.xlu0 %538
        %v540 = vsub.f32 %v536, %v539
        %v541 = vmul.f32 %v540, 1.442695
        %v542 = vpow.pop %v541
        %v543 = vsel %vm379, %v542, 0.0
        %544 = vadd.xlane.f32.xlu0 %v543
        %v545 = vpop.xlane.xlu0 %544
        %v546 = vrcp.pop %v545
        %v547 = vmul.f32 %v542, %v546
        %548 = vrot.lane.b32.xlu0 %v372, 48
        %v549 = vpop.permute.xlu0 %548
        %v552 = vsel %vm379, %v547, 0
        %554 = vmatpush.msra.mxu0 0.0
        %555 = vmatpush.msra.mxu0 0.0
        %556 = vmatpush.msra.mxu0 0.0
        %557 = vmatpush.msra.mxu0 0.0
        %558 = vmatpush.msra.mxu0 0.0
        %559 = vmatpush.msra.mxu0 0.0
        %560 = vmatpush.msra.mxu0 0.0
        %561 = vmatpush.msra.mxu0 0.0
        %562 = vmatpush.msra.mxu0 0.0
        %563 = vmatpush.msra.mxu0 0.0
        %564 = vmatpush.msra.mxu0 0.0
        %565 = vmatpush.msra.mxu0 0.0
        %566 = vmatpush.msra.mxu0 0.0
        %567 = vmatpush.msra.mxu0 0.0
        %568 = vmatpush.msra.mxu0 0.0
        %569 = vmatpush.msra.mxu0 %v549
        %570 = vmatmul.f32.gmra.mxu0 %v552
        %v571 = vpop.f32.mrf.mxu0
        %v572 = vadd.f32 0.0, %v571
        %573 = vdwg.mxu0
        %574 = vrot.lane.b32.xlu0 %v372, 104
        %v575 = vpop.permute.xlu0 %574
        %576 = vrot.lane.b32.xlu0 %v372, 72
        %v577 = vpop.permute.xlu0 %576
        %v578 = vsel %vm379, %v575, 0
        %v580 = vsel %vm379, %v577, 0
        %582 = vmatpush.xpose.msra.mxu0 0.0
        %583 = vmatpush.xpose.msra.mxu0 0.0
        %584 = vmatpush.xpose.msra.mxu0 0.0
        %585 = vmatpush.xpose.msra.mxu0 0.0
        %586 = vmatpush.xpose.msra.mxu0 0.0
        %587 = vmatpush.xpose.msra.mxu0 0.0
        %588 = vmatpush.xpose.msra.mxu0 0.0
        %589 = vmatpush.xpose.msra.mxu0 0.0
        %590 = vmatpush.xpose.msra.mxu0 0.0
        %591 = vmatpush.xpose.msra.mxu0 0.0
        %592 = vmatpush.xpose.msra.mxu0 0.0
        %593 = vmatpush.xpose.msra.mxu0 0.0
        %594 = vmatpush.xpose.msra.mxu0 0.0
        %595 = vmatpush.xpose.msra.mxu0 0.0
        %596 = vmatpush.xpose.msra.mxu0 0.0
        %597 = vmatpush.xpose.msra.mxu0 %v580
        %598 = vmatmul.f32.gmra.mxu0 %v578
        %v599 = vpop.f32.mrf.mxu0
        %v600 = vadd.f32 0.0, %v599
        %601 = vdwg.mxu0
        %v602 = vsel %vm375, -1e+09, %v600
        %v603 = vsel %vm379, %v602, -inf
        %604 = vmax.xlane.f32.xlu0 %v603
        %v605 = vpop.xlane.xlu0 %604
        %v606 = vsub.f32 %v602, %v605
        %v607 = vmul.f32 %v606, 1.442695
        %v608 = vpow.pop %v607
        %v609 = vsel %vm379, %v608, 0.0
        %610 = vadd.xlane.f32.xlu0 %v609
        %v611 = vpop.xlane.xlu0 %610
        %v612 = vrcp.pop %v611
        %v613 = vmul.f32 %v608, %v612
        %614 = vrot.lane.b32.xlu0 %v372, 40
        %v615 = vpop.permute.xlu0 %614
        %v618 = vsel %vm379, %v613, 0
        %620 = vmatpush.msra.mxu0 0.0
        %621 = vmatpush.msra.mxu0 0.0
        %622 = vmatpush.msra.mxu0 0.0
        %623 = vmatpush.msra.mxu0 0.0
        %624 = vmatpush.msra.mxu0 0.0
        %625 = vmatpush.msra.mxu0 0.0
        %626 = vmatpush.msra.mxu0 0.0
        %627 = vmatpush.msra.mxu0 0.0
        %628 = vmatpush.msra.mxu0 0.0
        %629 = vmatpush.msra.mxu0 0.0
        %630 = vmatpush.msra.mxu0 0.0
        %631 = vmatpush.msra.mxu0 0.0
        %632 = vmatpush.msra.mxu0 0.0
        %633 = vmatpush.msra.mxu0 0.0
        %634 = vmatpush.msra.mxu0 0.0
        %635 = vmatpush.msra.mxu0 %v615
        %636 = vmatmul.f32.gmra.mxu0 %v618
        %v637 = vpop.f32.mrf.mxu0
        %v638 = vadd.f32 0.0, %v637
        %639 = vdwg.mxu0
        %641 = vrot.lane.b32.xlu0 %v506, 8
        %v642 = vpop.permute.xlu0 %641
        %645 = vrot.lane.b32.xlu0 %v572, 16
        %v646 = vpop.permute.xlu0 %645
        %649 = vrot.lane.b32.xlu0 %v638, 24
        %v650 = vpop.permute.xlu0 %649
        %v652 = vsel %vm379, %v440, %v642
        %vm653 = vcmask 130048
        %v654 = vsel %vm653, %v652, %v646
        %vm655 = vcmask 195584
        %v656 = vsel %vm655, %v654, %v650
        %v657 = vld [vmem:[#allocation8] sm:$0xff]
        %v658 = vld [vmem:[#allocation8 + $0x8] sm:$0xff]
        %v659 = vld [vmem:[#allocation8 + $0x10] sm:$0xff]
        %v660 = vld [vmem:[#allocation8 + $0x18] sm:$0xff]
        %v661 = vld [vmem:[%s5] sm:$0x1]
        %v663 = vperm.slane %v661, 0
        %v666 = vsel %vm350, %v656, 0
        %668 = vmatpush.msra.mxu0 0.0
        %669 = vmatpush.msra.mxu0 0.0
        %670 = vmatpush.msra.mxu0 0.0
        %671 = vmatpush.msra.mxu0 0.0
        %672 = vmatpush.msra.mxu0 0.0
        %673 = vmatpush.msra.mxu0 0.0
        %674 = vmatpush.msra.mxu0 0.0
        %675 = vmatpush.msra.mxu0 0.0
        %676 = vmatpush.msra.mxu0 0.0
        %677 = vmatpush.msra.mxu0 0.0
        %678 = vmatpush.msra.mxu0 0.0
        %679 = vmatpush.msra.mxu0 0.0
        %680 = vmatpush.msra.mxu0 %v660
        %681 = vmatpush.msra.mxu0 %v659
        %682 = vmatpush.msra.mxu0 %v658
        %683 = vmatpush.msra.mxu0 %v657
        %684 = vmatmul.f32.gmra.mxu0 %v666
        %v685 = vpop.f32.mrf.mxu0
        %v686 = vadd.f32 %v663, %v685
        %687 = vdwg.mxu0
        %688 = vst.msk [vmem:[%s340] sm:$0xff] %vm350, %v686
        %s689 = sand.u32 %s171, 1
        %s690 = scalar_lea.sflag [#allocation4], %s689
        %s691 = sand.u32 %s171, 1
        %s692 = smul.addr %s691, 8
        %s693 = scalar_lea.vmem [#allocation10], %s692
        // Predicated region
        $region61: #{tpu_custom_call.1} parent=43 // pred_check
          %p694 = pneg %p181
        $region62: #{tpu_custom_call.1} parent=43 // pred_check_branch
          %696 = sbr.rel (%p694) target = $region64
        $region63: #{tpu_custom_call.1} parent=43 // pred_region
          %698 = vsyncadd %s690, 0
          %s699 = smul.addr %s27, 8
          %s700 = scalar_lea.hbm %s6, %s699
          %s702 = sshll.u32 %s693, 4
          %s703 = int_to_ptr.vmem [resolvable:$true] %s702
          %s704 = sshll.u32 %s700, 4
          %s705 = int_to_ptr.hbm [resolvable:$true] %s704
          %707 = dma.vmem_to_hbm [thread:$0]  %s703, 128, %s705, %s690
        $region64: #{tpu_custom_call.1} parent=43 // pred_fallthru
          _
      $region44: #{tpu_custom_call.1} parent=5 // pred_fallthru
        _
      %p708 = scmp.le.s32.totalorder 2, %s22
      // Predicated region
      $region65: #{tpu_custom_call.1} parent=5 // pred_check
        %p709 = pneg %p708
      $region66: #{tpu_custom_call.1} parent=5 // pred_check_branch
        %711 = sbr.rel (%p709) target = $region68
      $region67: #{tpu_custom_call.1} parent=5 // pred_region
        %s712 = ssub.s32 %s22, 2
        // Predicated region
        $region69: #{tpu_custom_call.1} parent=67 // pred_check
          %p713 = pneg %p187
        $region70: #{tpu_custom_call.1} parent=67 // pred_check_branch
          %715 = sbr.rel (%p713) target = $region72
        $region71: #{tpu_custom_call.1} parent=67 // pred_region
          %s716 = sand.u32 %s172, 1
          %s717 = scalar_lea.sflag [#allocation4], %s716
          %s718 = sand.u32 %s172, 1
          %s719 = smul.addr %s718, 8
          %s720 = scalar_lea.vmem [#allocation10], %s719
          %722 = dma.done %s717, 128
        $region72: #{tpu_custom_call.1} parent=67 // pred_fallthru
          _
      $region68: #{tpu_custom_call.1} parent=5 // pred_fallthru
        _
    $region6: #{tpu_custom_call.1} parent=1 // loop_footer
      %s26 = sadd.s32 1, %s22
    $region7: #{tpu_custom_call.1} parent=1 // loop_footer_branch
      %21 = sbr.rel target = $region3
    $region8: #{tpu_custom_call.1} parent=1 // loop_exit
      _
    %723 = vsyncpa [#allocation3], 1
    %s724 = scalar_lea.sflag [#allocation3], 1
    %725 = vsyncpa %s724, 1
    %726 = vsyncpa [#allocation6], 1
    %s727 = scalar_lea.sflag [#allocation6], 1
    %728 = vsyncpa %s727, 1
    %729 = vsyncpa [#allocation9], 1
    %730 = vsyncpa [#allocation4], 1
    %s731 = scalar_lea.sflag [#allocation4], 1
    %732 = vsyncpa %s731, 1

</llo_original>
